<compile_context>
chip_gen: v6e
topology: v6e:2x2x1
jax: 0.10.0
libtpu: 0.0.40
codegen_flags: <defaults>
</compile_context>

<pallas_src>
import numpy as np
import jax
import jax.numpy as jnp
from jax.experimental import pallas as pl
from jax.experimental.pallas import tpu as pltpu


LANES = 128                           # vreg lane width: last dim of every block
TARGET_BLOCK_BYTES = 4 * 1024 * 1024  # ~4 MiB per buffer (>=85% of HBM roofline on all gens)
VMEM_LIMIT_BYTES = 32 * 1024 * 1024   # 4 buffers x 4 MiB double-buffered fits with headroom


# ------------------------------------------------------------------ kernel

def hard_swish_kernel(x_ref, o_ref):
    x = x_ref[...]
    # x * relu6(x + 3) / 6  — clamp + multiplies all on the VPU, single pass.
    o_ref[...] = x * (jnp.clip(x + 3.0, 0.0, 6.0) * (1.0 / 6.0))


# ------------------------------------------------------------------ helpers

def _round_up(v, m):
    return ((v + m - 1) // m) * m


def _sublane_multiple(dtype):
    """Native sublane packing: 8 for 4-byte, 16 for 2-byte, 32 for 1-byte dtypes."""
    itemsize = jnp.dtype(dtype).itemsize
    return max(8, 32 // max(itemsize, 1))


def _pick_block_rows(rows_needed, sub, itemsize):
    """Choose a sublane-aligned block row count.

    Priorities: (1) ~TARGET_BLOCK_BYTES per buffer, (2) >= 2 grid steps when the
    input can be split (v7x megacore), (3) exactly divide rows_needed so the
    wrapper's pad/slice fast path fires.
    """
    target_rows = max(sub, TARGET_BLOCK_BYTES // (LANES * itemsize))
    target_rows = max(sub, (target_rows // sub) * sub)

    cand = min(target_rows, rows_needed)
    # Guarantee >= 2 grid steps whenever splitting is possible (second TC on v7x).
    if rows_needed >= 2 * sub:
        cand = min(cand, max(sub, (rows_needed // 2 // sub) * sub))
    cand = max(sub, (cand // sub) * sub)

    # Prefer the largest block <= cand that divides rows_needed exactly
    # (bounded trace-time search; padding is the fallback).
    c, steps = cand, 0
    while c >= sub and steps < 512:
        if rows_needed % c == 0:
            return c
        c -= sub
        steps += 1
    return cand


# ------------------------------------------------------------------ wrapper

@jax.jit
def hard_swish(x):
    """Elementwise HardSwish for any input shape / floating dtype."""
    orig_shape = x.shape
    dtype = x.dtype
    itemsize = jnp.dtype(dtype).itemsize
    sub = _sublane_multiple(dtype)

    flat = x.reshape(-1)
    n = flat.shape[0]

    # Lane-dense 2D layout: (rows, 128), rows aligned to the dtype's sublane pack.
    rows_needed = _round_up(pl.cdiv(n, LANES), sub)
    block_rows = _pick_block_rows(rows_needed, sub, itemsize)
    padded_rows = _round_up(rows_needed, block_rows)
    padded_n = padded_rows * LANES

    exact_fit = padded_n == n
    if not exact_fit:
        # hardswish(0) == 0, so zero padding is numerically safe; it is sliced away below.
        flat = jnp.pad(flat, (0, padded_n - n))
    x2d = flat.reshape(padded_rows, LANES)

    grid = (padded_rows // block_rows,)
    out2d = pl.pallas_call(
        hard_swish_kernel,
        out_shape=jax.ShapeDtypeStruct((padded_rows, LANES), dtype),
        grid=grid,
        in_specs=[pl.BlockSpec((block_rows, LANES), lambda i: (i, 0))],
        out_specs=pl.BlockSpec((block_rows, LANES), lambda i: (i, 0)),
        compiler_params=pltpu.CompilerParams(
            dimension_semantics=("parallel",),
            vmem_limit_bytes=VMEM_LIMIT_BYTES,
        ),
    )(x2d)

    if exact_fit:
        # Fast path: no pad on the way in, no slice on the way out — reshape is
        # metadata-only under jit, so the only HBM traffic is the kernel's own.
        return out2d.reshape(orig_shape)
    return out2d.reshape(-1)[:n].reshape(orig_shape)


# ------------------------------------------------------------------ main

if __name__ == "__main__":
    key = jax.random.PRNGKey(0)
    # Small NCHW activation-shaped input: (N, C, H, W); scale spans the +/-3 knees.
    x = jax.random.normal(key, (2, 4, 16, 16), jnp.float32) * 4.0

    out = hard_swish(x)
    out = jax.block_until_ready(out)

    # Pure-JAX reference: x * relu6(x + 3) / 6
    ref = x * jnp.clip(x + 3.0, 0.0, 6.0) / 6.0

    assert out.shape == x.shape, out.shape
    assert out.dtype == x.dtype, out.dtype
    np.testing.assert_allclose(np.asarray(out), np.asarray(ref), rtol=1e-6, atol=1e-6)
    assert bool(jnp.all(jnp.isfinite(out)))
    print("KERNEL_OK")
</pallas_src>

<mosaic_0001>
module attributes {stable_mosaic.version = 11 : i64} {
  func.func @hard_swish_kernel(%arg0: i32, %arg1: memref<8x128xf32, #tpu.memory_space<vmem>>, %arg2: memref<8x128xf32, #tpu.memory_space<vmem>>) attributes {dimension_semantics = [#tpu.dimension_semantics<parallel>], iteration_bounds = array<i64: 2>, scalar_prefetch = 0 : i64, scratch_operands = 0 : i64, tpu.core_type = #tpu.core_type<tc>, window_params = [{transform_indices = @transform_0, window_bounds = array<i64: 8, 128>}, {transform_indices = @transform_1, window_bounds = array<i64: 8, 128>}]} {
    %c0 = arith.constant 0 : index
    %c0_0 = arith.constant 0 : index
    %0 = vector.load %arg1[%c0, %c0_0] : memref<8x128xf32, #tpu.memory_space<vmem>>, vector<8x128xf32>
    %cst = arith.constant 3.000000e+00 : f32
    %1 = vector.broadcast %cst : f32 to vector<8x128xf32>
    %2 = arith.addf %0, %1 : vector<8x128xf32>
    %cst_1 = arith.constant 0.000000e+00 : f32
    %cst_2 = arith.constant 6.000000e+00 : f32
    %3 = vector.broadcast %cst_1 : f32 to vector<8x128xf32>
    %4 = arith.maximumf %3, %2 : vector<8x128xf32>
    %5 = vector.broadcast %cst_2 : f32 to vector<8x128xf32>
    %6 = arith.minimumf %5, %4 : vector<8x128xf32>
    %cst_3 = arith.constant 0.166666672 : f32
    %7 = vector.broadcast %cst_3 : f32 to vector<8x128xf32>
    %8 = arith.mulf %6, %7 : vector<8x128xf32>
    %9 = arith.mulf %0, %8 : vector<8x128xf32>
    %c0_4 = arith.constant 0 : index
    %c0_5 = arith.constant 0 : index
    %10 = vector.load %arg2[%c0_4, %c0_5] : memref<8x128xf32, #tpu.memory_space<vmem>>, vector<8x128xf32>
    tpu.vector_store %arg2[%c0_4, %c0_5], %9 {strides = array<i32>} : memref<8x128xf32, #tpu.memory_space<vmem>>, vector<8x128xf32>,
    return
  }
  func.func @transform_0(%arg0: i32) -> (i32, i32) {
    %c0_i32 = arith.constant 0 : i32
    %c0_i32_0 = arith.constant 0 : i32
    return %arg0, %c0_i32 : i32, i32
  }
  func.func @transform_1(%arg0: i32) -> (i32, i32) {
    %c0_i32 = arith.constant 0 : i32
    %c0_i32_0 = arith.constant 0 : i32
    return %arg0, %c0_i32 : i32, i32
  }
}

</mosaic_0001>

<llo_original>
// kernel: hard_swish.1
$region0: #{hard_swish.1}
  #allocation0 [shape = 'u32[]', space=smem, size = 0x4, offset = 0x4, fixed_abs, tag = 'smem constant byte address 0x4 - core index']
  #allocation1 [shape = 'u32[144,128]{1,0:T(1,128)}', space=vmem, size = 0x12000, scoped, tag = 'internal scratch']
  %s0 = inlined_call_operand.vmem [shape: f32[16,128], index: 0, kind: input, shape index: {}]
  %s1 = inlined_call_operand.vmem [shape: f32[16,128], index: 1, kind: output, shape index: {}]
  %s2 = sld [smem:[#allocation0]]
  $region37: #{hard_swish.1} parent=0
    _
  %s4 = ssub.s32 1, %s2
  %s5 = scalar_select 0, %s4, %s2
  loop: start=0, step=1, limit=4
  $region2: #{hard_swish.1} parent=0 // loop_pre_header
    _
  $region3: #{hard_swish.1} parent=0 // loop_header
    %s7 = sphi 0, %s11
    %p8 = scmp.ge.s32.totalorder %s7, 4
    %s17 = sphi 0, %s19
    %s20 = sphi 0, %s17
    %s21 = sphi 0, %s20
    %s37 = sphi 0, %s21
    %s43 = sphi 0, %s45
    %s46 = sphi 0, %s43
    %s47 = sphi 0, %s46
    %s63 = sphi 0, %s47
  $region4: #{hard_swish.1} parent=0 // loop_header_branch
    %10 = sbr.rel (%p8) target = $region8
  $region5: #{hard_swish.1} parent=0 // loop_body
    %s12 = ssub.s32 %s7, 1
    %s13 = ssub.s32 %s7, 2
    %s14 = sadd.s32 %s7, 1
    %s15 = ssub.s32 %s7, %s14
    %p16 = scmp.eq.s32.totalorder %s15, 0
    %s18 = sadd.s32 %s17, 1
    %s19 = scalar_select %p16, %s17, %s18
    %p22 = pneg %p16
    %p23 = scmp.eq.s32.totalorder %s7, 1
    %p24 = por %p22, %p23
    %p25 = scmp.ne.s32.totalorder %s17, %s20
    %p26 = scmp.eq.s32.totalorder %s7, 0
    %p27 = por %p25, %p26
    %p28 = scmp.ne.s32.totalorder %s17, %s20
    %p29 = scmp.eq.s32.totalorder %s12, 1
    %p30 = por %p28, %p29
    %p31 = scmp.ne.s32.totalorder %s20, %s21
    %p32 = scmp.eq.s32.totalorder %s12, 0
    %p33 = por %p31, %p32
    %p34 = scmp.ne.s32.totalorder %s20, %s21
    %p35 = scmp.eq.s32.totalorder %s13, 1
    %p36 = por %p34, %p35
    %p38 = scmp.ne.s32.totalorder %s21, %s37
    %p39 = scmp.eq.s32.totalorder %s13, 0
    %p40 = por %p38, %p39
    %s41 = ssub.s32 %s7, %s14
    %p42 = scmp.eq.s32.totalorder %s41, 0
    %s44 = sadd.s32 %s43, 1
    %s45 = scalar_select %p42, %s43, %s44
    %p48 = pneg %p42
    %p49 = scmp.eq.s32.totalorder %s7, 1
    %p50 = por %p48, %p49
    %p51 = scmp.ne.s32.totalorder %s43, %s46
    %p52 = scmp.eq.s32.totalorder %s7, 0
    %p53 = por %p51, %p52
    %p54 = scmp.ne.s32.totalorder %s43, %s46
    %p55 = scmp.eq.s32.totalorder %s12, 1
    %p56 = por %p54, %p55
    %p57 = scmp.ne.s32.totalorder %s46, %s47
    %p58 = scmp.eq.s32.totalorder %s12, 0
    %p59 = por %p57, %p58
    %p60 = scmp.ne.s32.totalorder %s46, %s47
    %p61 = scmp.eq.s32.totalorder %s13, 1
    %p62 = por %p60, %p61
    %p64 = scmp.ne.s32.totalorder %s47, %s63
    %p65 = scmp.eq.s32.totalorder %s13, 0
    %p66 = por %p64, %p65
    %p67 = scmp.le.s32.totalorder 1, %s7
    %p68 = scmp.lt.s32.totalorder %s7, 3
    %p69 = pnand %p67, %p68
    %p70 = pneg %p69
    // Predicated region
    $region9: #{hard_swish.1} parent=5 // pred_check
      _
    $region10: #{hard_swish.1} parent=5 // pred_check_branch
      %72 = sbr.rel (%p69) target = $region12
    $region11: #{hard_swish.1} parent=5 // pred_region
      %s73 = ssub.s32 %s7, 1
    $region12: #{hard_swish.1} parent=5 // pred_fallthru
      _
    %p74 = scmp.lt.s32.totalorder %s7, 2
    // Predicated region
    $region13: #{hard_swish.1} parent=5 // pred_check
      %p75 = pneg %p74
    $region14: #{hard_swish.1} parent=5 // pred_check_branch
      %77 = sbr.rel (%p75) target = $region16
    $region15: #{hard_swish.1} parent=5 // pred_region
      // Predicated region
      $region17: #{hard_swish.1} parent=15 // pred_check
        %p78 = pneg %p27
      $region18: #{hard_swish.1} parent=15 // pred_check_branch
        %80 = sbr.rel (%p78) target = $region20
      $region19: #{hard_swish.1} parent=15 // pred_region
        %p81 = scmp.lt.s32.totalorder %s7, 1
        %s82 = scalar_select %p81, %s7, 1
        %s83 = smul.addr %s82, 8
        %s84 = scalar_lea.vmem %s0, %s83
      $region20: #{hard_swish.1} parent=15 // pred_fallthru
        _
    $region16: #{hard_swish.1} parent=5 // pred_fallthru
      _
    %p85 = scmp.le.s32.totalorder 1, %s7
    %p86 = scmp.lt.s32.totalorder %s7, 3
    %p87 = pnand %p85, %p86
    %p88 = pneg %p87
    // Predicated region
    $region21: #{hard_swish.1} parent=5 // pred_check
      _
    $region22: #{hard_swish.1} parent=5 // pred_check_branch
      %90 = sbr.rel (%p87) target = $region24
    $region23: #{hard_swish.1} parent=5 // pred_region
      %s91 = ssub.s32 %s7, 1
      %p92 = scmp.lt.s32.totalorder %s12, 1
      %s93 = scalar_select %p92, %s12, 1
      %s94 = smul.addr %s93, 8
      %s95 = scalar_lea.vmem %s0, %s94
      %p96 = pneg %p33
      %p97 = pneg %p30
      %p98 = pneg %p59
      %p99 = pneg %p56
      %p100 = scmp.lt.s32.totalorder %s12, 1
      %s101 = scalar_select %p100, %s12, 1
      %s102 = smul.addr %s101, 8
      %s103 = scalar_lea.vmem %s1, %s102
      %p104 = scmp.lt.s32.totalorder %s12, 1
      %s105 = scalar_select %p104, %s12, 1
      %s106 = smul.addr %s105, 8
      %s107 = scalar_lea.vmem %s0, %s106
      %p108 = scmp.lt.s32.totalorder %s12, 1
      %s109 = scalar_select %p108, %s12, 1
      %s110 = smul.addr %s109, 8
      %s111 = scalar_lea.vmem %s1, %s110
      %v112 = vld [vmem:[%s107] sm:$0xff]
      %v113 = vadd.f32 %v112, 3.0
      %v114 = vmax.f32 %v113, 0.0
      %v115 = vmin.f32 %v114, 6.0
      %v116 = vmul.f32 %v115, 0.16666667
      %v117 = vmul.f32 %v112, %v116
      %118 = vst [vmem:[%s111] sm:$0xff] %v117
      %p119 = scmp.lt.s32.totalorder %s12, 1
      %s120 = scalar_select %p119, %s12, 1
      %s121 = smul.addr %s120, 8
      %s122 = scalar_lea.vmem %s1, %s121
      // Predicated region
      $region25: #{hard_swish.1} parent=23 // pred_check
        %p123 = pneg %p56
      $region26: #{hard_swish.1} parent=23 // pred_check_branch
        %125 = sbr.rel (%p123) target = $region28
      $region27: #{hard_swish.1} parent=23 // pred_region
        _
      $region28: #{hard_swish.1} parent=23 // pred_fallthru
        _
    $region24: #{hard_swish.1} parent=5 // pred_fallthru
      _
    %p126 = scmp.le.s32.totalorder 2, %s7
    // Predicated region
    $region29: #{hard_swish.1} parent=5 // pred_check
      %p127 = pneg %p126
    $region30: #{hard_swish.1} parent=5 // pred_check_branch
      %129 = sbr.rel (%p127) target = $region32
    $region31: #{hard_swish.1} parent=5 // pred_region
      %s130 = ssub.s32 %s7, 2
      // Predicated region
      $region33: #{hard_swish.1} parent=31 // pred_check
        %p131 = pneg %p62
      $region34: #{hard_swish.1} parent=31 // pred_check_branch
        %133 = sbr.rel (%p131) target = $region36
      $region35: #{hard_swish.1} parent=31 // pred_region
        %p134 = scmp.lt.s32.totalorder %s13, 1
        %s135 = scalar_select %p134, %s13, 1
        %s136 = smul.addr %s135, 8
        %s137 = scalar_lea.vmem %s1, %s136
      $region36: #{hard_swish.1} parent=31 // pred_fallthru
        _
    $region32: #{hard_swish.1} parent=5 // pred_fallthru
      _
  $region6: #{hard_swish.1} parent=0 // loop_footer
    %s11 = sadd.s32 1, %s7
  $region7: #{hard_swish.1} parent=0 // loop_footer_branch
    %6 = sbr.rel target = $region3
  $region8: #{hard_swish.1} parent=0 // loop_exit
    _

</llo_original>
